<compile_context>
chip_gen: v5e
topology: v5e:2x2
jax: 0.10.0
libtpu: 0.0.40
codegen_flags: <defaults>
</compile_context>

<pallas_src>
import functools

import jax
import jax.numpy as jnp
from jax import lax
from jax.experimental import pallas as pl
from jax.experimental.pallas import tpu as pltpu


def fused_net_kernel(x2_ref, x1_ref, w1d_ref, wfold_ref, b1_ref, w2_ref,
                     b2_ref, o_ref, *, num_cats, vocab_size):
    """One-hot(x2) folded-embedding matmul + Linear -> Tanh -> Linear(pad 128).

    x2_ref   : VMEM [B, C]   int32  categorical indices
    x1_ref   : VMEM [B, L]   f32    dense features
    w1d_ref  : VMEM [L, 256] f32    dense half of the first Linear
    wfold_ref: VMEM [C*V, 256] f32  embedding folded into the first Linear
    b1_ref   : VMEM [1, 256] f32
    w2_ref   : VMEM [256, 128] f32  (zero-padded from [256, 6])
    b2_ref   : VMEM [1, 128] f32    (zero-padded)
    o_ref    : VMEM [B, 128] f32    lane-dense output; caller slices [:, :6]
    """
    B = x1_ref.shape[0]
    C = num_cats
    V = vocab_size
    CV = C * V

    # Build the [B, C*V] one-hot with C lane-wise compares against an iota.
    # Targets for different categories live in disjoint column blocks, so the
    # sum of the per-category masks is exactly the concatenated one-hot.
    col = lax.broadcasted_iota(jnp.int32, (B, CV), 1)          # [B, C*V]
    x2v = x2_ref[...]                                          # [B, C] int32
    onehot = jnp.zeros((B, CV), jnp.float32)
    for c in range(C):                                         # C=4, static
        target = x2v[:, c:c + 1] + c * V                       # [B, 1]
        onehot = onehot + (col == target).astype(jnp.float32)

    # First layer: dense part (K=L, tiny) + folded embedding part (K=C*V=256).
    h = jnp.dot(x1_ref[...], w1d_ref[...], preferred_element_type=jnp.float32)
    h = h + jnp.dot(onehot, wfold_ref[...],
                    preferred_element_type=jnp.float32)
    h = jnp.tanh(h + b1_ref[...])                              # EUP tanh

    # Output projection into the lane-dense padded width.
    o = jnp.dot(h, w2_ref[...], preferred_element_type=jnp.float32)
    o_ref[...] = (o + b2_ref[...]).astype(o_ref.dtype)


def net_forward(x1, x2, params, out_dim=6):
    w1d, w_fold, b1, w2p, b2p = params
    B = x1.shape[0]
    C = x2.shape[1]
    CV = w_fold.shape[0]
    V = CV // C
    OP = w2p.shape[1]            # lane-dense padded output width (128)

    kernel = functools.partial(fused_net_kernel, num_cats=C, vocab_size=V)

    out_p = pl.pallas_call(
        kernel,
        out_shape=jax.ShapeDtypeStruct((B, OP), jnp.float32),
        in_specs=[
            pl.BlockSpec(memory_space=pltpu.MemorySpace.VMEM),   # x2 indices
            pl.BlockSpec(memory_space=pltpu.MemorySpace.VMEM),   # x1
            pl.BlockSpec(memory_space=pltpu.MemorySpace.VMEM),   # w1 dense
            pl.BlockSpec(memory_space=pltpu.MemorySpace.VMEM),   # w_fold
            pl.BlockSpec(memory_space=pltpu.MemorySpace.VMEM),   # b1
            pl.BlockSpec(memory_space=pltpu.MemorySpace.VMEM),   # w2 (padded)
            pl.BlockSpec(memory_space=pltpu.MemorySpace.VMEM),   # b2 (padded)
        ],
        out_specs=pl.BlockSpec(memory_space=pltpu.MemorySpace.VMEM),
    )(x2, x1, w1d, w_fold, b1, w2p, b2p)

    return out_p[:, :out_dim]


def init_raw_params(key, lin_input_size, embs_input_size, embs_input_cats,
                    embs_output_size, hidden=256, out_dim=6):
    """Raw (PyTorch-layout-equivalent, already transposed) parameters."""
    F = lin_input_size + embs_output_size * embs_input_cats
    k = jax.random.split(key, 5)
    emb_table = jax.random.normal(
        k[0], (embs_input_size, embs_output_size), jnp.float32)
    # PyTorch Linear computes x @ W.T + b with W: [out, in]; we store the
    # already-transposed [in, out] weight so the kernel does plain matmuls.
    w1 = jax.random.normal(k[1], (F, hidden), jnp.float32) * 0.05
    b1 = jax.random.normal(k[2], (1, hidden), jnp.float32) * 0.05
    w2 = jax.random.normal(k[3], (hidden, out_dim), jnp.float32) * 0.05
    b2 = jax.random.normal(k[4], (1, out_dim), jnp.float32) * 0.05
    return emb_table, w1, b1, w2, b2


def fold_params(raw, lin_input_size, embs_input_cats, embs_output_size,
                out_pad=128):
    """One-time kernel parameter prep (fold embedding into Linear1, pad out)."""
    emb_table, w1, b1, w2, b2 = raw
    L, C, E = lin_input_size, embs_input_cats, embs_output_size
    V = emb_table.shape[0]
    H = w1.shape[1]
    out_dim = w2.shape[1]

    w1_dense = w1[:L, :]                                   # [L, H]
    w1_emb = w1[L:, :].reshape(C, E, H)                    # [C, E, H]
    # W_fold[c*V + v, :] = emb_table[v] @ W1[L + c*E : L + (c+1)*E, :]
    w_fold = jnp.einsum('ve,ceh->cvh', emb_table, w1_emb).reshape(C * V, H)

    w2p = jnp.zeros((H, out_pad), jnp.float32).at[:, :out_dim].set(w2)
    b2p = jnp.zeros((1, out_pad), jnp.float32).at[:, :out_dim].set(b2)
    return (w1_dense, w_fold, b1, w2p, b2p)


if __name__ == "__main__":
    # Small shapes consistent with the module's forward.
    batch = 8
    lin_input_size = 32       # dense features in x1
    embs_input_size = 64      # embedding vocab size (V)
    embs_input_cats = 4       # categorical columns in x2 (C)
    embs_output_size = 8      # embedding dim (E)
    out_dim = 6

    key = jax.random.PRNGKey(0)
    kx1, kx2, kp = jax.random.split(key, 3)

    x1 = jax.random.normal(kx1, (batch, lin_input_size), jnp.float32)
    x2 = jax.random.randint(kx2, (batch, embs_input_cats), 0, embs_input_size,
                            jnp.int32)

    raw = init_raw_params(kp, lin_input_size, embs_input_size,
                          embs_input_cats, embs_output_size, out_dim=out_dim)
    params = fold_params(raw, lin_input_size, embs_input_cats,
                         embs_output_size)

    fwd = jax.jit(functools.partial(net_forward, out_dim=out_dim))
    out = jax.block_until_ready(fwd(x1, x2, params))

    # Pure-JAX reference of the ORIGINAL (unfolded) forward pass.
    emb_table, w1, b1, w2, b2 = raw
    x2f = jnp.take(emb_table, x2, axis=0).reshape(batch, -1)
    x3 = jnp.concatenate([x1, x2f], axis=1)
    ref = jnp.tanh(x3 @ w1 + b1) @ w2 + b2
    assert out.shape == (batch, out_dim)
    assert jnp.allclose(out, ref, atol=1e-4, rtol=1e-4)

    print("KERNEL_OK")
</pallas_src>

<mosaic_0001>
module attributes {stable_mosaic.version = 11 : i64} {
  func.func @fused_net_kernel(%arg0: memref<8x4xi32, #tpu.memory_space<vmem>>, %arg1: memref<8x32xf32, #tpu.memory_space<vmem>>, %arg2: memref<32x256xf32, #tpu.memory_space<vmem>>, %arg3: memref<256x256xf32, #tpu.memory_space<vmem>>, %arg4: memref<1x256xf32, #tpu.memory_space<vmem>>, %arg5: memref<256x128xf32, #tpu.memory_space<vmem>>, %arg6: memref<1x128xf32, #tpu.memory_space<vmem>>, %arg7: memref<8x128xf32, #tpu.memory_space<vmem>>) attributes {dimension_semantics = [], scalar_prefetch = 0 : i64, scratch_operands = 0 : i64, tpu.core_type = #tpu.core_type<tc>} {
    %0 = tpu.iota {dimensions = array<i32: 1>} : vector<8x256xi32>
    %c0 = arith.constant 0 : index
    %c0_0 = arith.constant 0 : index
    %1 = vector.load %arg0[%c0, %c0_0] : memref<8x4xi32, #tpu.memory_space<vmem>>, vector<8x4xi32>
    %cst = arith.constant 0.000000e+00 : f32
    %2 = vector.broadcast %cst : f32 to vector<8x256xf32>
    %3 = vector.extract_strided_slice %1 {offsets = [0, 0], sizes = [8, 1], strides = [1, 1]} : vector<8x4xi32> to vector<8x1xi32>
    %c0_i32 = arith.constant 0 : i32
    %4 = vector.broadcast %c0_i32 : i32 to vector<8x1xi32>
    %5 = arith.addi %3, %4 : vector<8x1xi32>
    %6 = vector.broadcast %5 : vector<8x1xi32> to vector<8x256xi32>
    %7 = arith.cmpi eq, %0, %6 : vector<8x256xi32>
    %8 = arith.extui %7 : vector<8x256xi1> to vector<8x256xi32>
    %9 = arith.sitofp %8 : vector<8x256xi32> to vector<8x256xf32>
    %10 = arith.addf %2, %9 : vector<8x256xf32>
    %11 = vector.extract_strided_slice %1 {offsets = [0, 1], sizes = [8, 1], strides = [1, 1]} : vector<8x4xi32> to vector<8x1xi32>
    %c64_i32 = arith.constant 64 : i32
    %12 = vector.broadcast %c64_i32 : i32 to vector<8x1xi32>
    %13 = arith.addi %11, %12 : vector<8x1xi32>
    %14 = vector.broadcast %13 : vector<8x1xi32> to vector<8x256xi32>
    %15 = arith.cmpi eq, %0, %14 : vector<8x256xi32>
    %16 = arith.extui %15 : vector<8x256xi1> to vector<8x256xi32>
    %17 = arith.sitofp %16 : vector<8x256xi32> to vector<8x256xf32>
    %18 = arith.addf %10, %17 : vector<8x256xf32>
    %19 = vector.extract_strided_slice %1 {offsets = [0, 2], sizes = [8, 1], strides = [1, 1]} : vector<8x4xi32> to vector<8x1xi32>
    %c128_i32 = arith.constant 128 : i32
    %20 = vector.broadcast %c128_i32 : i32 to vector<8x1xi32>
    %21 = arith.addi %19, %20 : vector<8x1xi32>
    %22 = vector.broadcast %21 : vector<8x1xi32> to vector<8x256xi32>
    %23 = arith.cmpi eq, %0, %22 : vector<8x256xi32>
    %24 = arith.extui %23 : vector<8x256xi1> to vector<8x256xi32>
    %25 = arith.sitofp %24 : vector<8x256xi32> to vector<8x256xf32>
    %26 = arith.addf %18, %25 : vector<8x256xf32>
    %27 = vector.extract_strided_slice %1 {offsets = [0, 3], sizes = [8, 1], strides = [1, 1]} : vector<8x4xi32> to vector<8x1xi32>
    %c192_i32 = arith.constant 192 : i32
    %28 = vector.broadcast %c192_i32 : i32 to vector<8x1xi32>
    %29 = arith.addi %27, %28 : vector<8x1xi32>
    %30 = vector.broadcast %29 : vector<8x1xi32> to vector<8x256xi32>
    %31 = arith.cmpi eq, %0, %30 : vector<8x256xi32>
    %32 = arith.extui %31 : vector<8x256xi1> to vector<8x256xi32>
    %33 = arith.sitofp %32 : vector<8x256xi32> to vector<8x256xf32>
    %34 = arith.addf %26, %33 : vector<8x256xf32>
    %c0_1 = arith.constant 0 : index
    %c0_2 = arith.constant 0 : index
    %35 = vector.load %arg1[%c0_1, %c0_2] : memref<8x32xf32, #tpu.memory_space<vmem>>, vector<8x32xf32>
    %c0_3 = arith.constant 0 : index
    %c0_4 = arith.constant 0 : index
    %36 = vector.load %arg2[%c0_3, %c0_4] : memref<32x256xf32, #tpu.memory_space<vmem>>, vector<32x256xf32>
    %cst_5 = arith.constant dense<0.000000e+00> : vector<8x256xf32>
    %37 = tpu.matmul %35, %36, %cst_5 {dimension_numbers = #tpu.dot_dimension_numbers<[1], [0], [0], [1], [0, 0, 1, 1], [], []>} : vector<8x32xf32>, vector<32x256xf32>, vector<8x256xf32> -> vector<8x256xf32>
    %c0_6 = arith.constant 0 : index
    %c0_7 = arith.constant 0 : index
    %38 = vector.load %arg3[%c0_6, %c0_7] : memref<256x256xf32, #tpu.memory_space<vmem>>, vector<256x256xf32>
    %cst_8 = arith.constant dense<0.000000e+00> : vector<8x256xf32>
    %39 = tpu.matmul %34, %38, %cst_8 {dimension_numbers = #tpu.dot_dimension_numbers<[1], [0], [0], [1], [0, 0, 1, 1], [], []>} : vector<8x256xf32>, vector<256x256xf32>, vector<8x256xf32> -> vector<8x256xf32>
    %40 = arith.addf %37, %39 : vector<8x256xf32>
    %c0_9 = arith.constant 0 : index
    %c0_10 = arith.constant 0 : index
    %41 = vector.load %arg4[%c0_9, %c0_10] : memref<1x256xf32, #tpu.memory_space<vmem>>, vector<1x256xf32>
    %42 = vector.broadcast %41 : vector<1x256xf32> to vector<8x256xf32>
    %43 = arith.addf %40, %42 : vector<8x256xf32>
    %44 = math.tanh %43 : vector<8x256xf32>
    %c0_11 = arith.constant 0 : index
    %c0_12 = arith.constant 0 : index
    %45 = vector.load %arg5[%c0_11, %c0_12] : memref<256x128xf32, #tpu.memory_space<vmem>>, vector<256x128xf32>
    %cst_13 = arith.constant dense<0.000000e+00> : vector<8x128xf32>
    %46 = tpu.matmul %44, %45, %cst_13 {dimension_numbers = #tpu.dot_dimension_numbers<[1], [0], [0], [1], [0, 0, 1, 1], [], []>} : vector<8x256xf32>, vector<256x128xf32>, vector<8x128xf32> -> vector<8x128xf32>
    %c0_14 = arith.constant 0 : index
    %c0_15 = arith.constant 0 : index
    %47 = vector.load %arg6[%c0_14, %c0_15] : memref<1x128xf32, #tpu.memory_space<vmem>>, vector<1x128xf32>
    %48 = vector.broadcast %47 : vector<1x128xf32> to vector<8x128xf32>
    %49 = arith.addf %46, %48 : vector<8x128xf32>
    %c0_16 = arith.constant 0 : index
    %c0_17 = arith.constant 0 : index
    %50 = vector.load %arg7[%c0_16, %c0_17] : memref<8x128xf32, #tpu.memory_space<vmem>>, vector<8x128xf32>
    tpu.vector_store %arg7[%c0_16, %c0_17], %49 {strides = array<i32>} : memref<8x128xf32, #tpu.memory_space<vmem>>, vector<8x128xf32>,
    return
  }
}

</mosaic_0001>

<llo_original>
// kernel: net_forward.1
$region0: #{net_forward.1}
  #allocation0 [shape = 'u32[]', space=smem, size = 0x4, offset = 0x4, fixed_abs, tag = 'smem constant byte address 0x4 - core index']
  #allocation1 [shape = 'u32[72,128]{1,0:T(1,128)}', space=vmem, size = 0x9000, scoped, tag = 'internal scratch']
  %s0 = inlined_call_operand.vmem [shape: s32[8,4], index: 0, kind: input, shape index: {}]
  %s1 = inlined_call_operand.vmem [shape: f32[8,32], index: 1, kind: input, shape index: {}]
  %s2 = inlined_call_operand.hbm [shape: f32[32,256], index: 2, kind: input, shape index: {}]
  %s3 = inlined_call_operand.hbm [shape: f32[256,256], index: 3, kind: input, shape index: {}]
  %s4 = inlined_call_operand.vmem [shape: f32[1,256], index: 4, kind: input, shape index: {}]
  %s5 = inlined_call_operand.hbm [shape: f32[256,128], index: 5, kind: input, shape index: {}]
  %s6 = inlined_call_operand.vmem [shape: f32[1,128], index: 6, kind: input, shape index: {}]
  %s7 = inlined_call_operand.hbm [shape: f32[8,128], index: 7, kind: output, shape index: {}]
  %s8 = sld [smem:[#allocation0]]
  $region50: #{net_forward.1} parent=0
    _
  %s10 = ssub.s32 1, %s8
  %s11 = scalar_select 0, %s10, %s8
  $region1: #{net_forward.1} parent=0
    #allocation2 [shape = 'u8[32768]{0}', space=vmem, size = 0x8000, scoped, tag = 'input window, operand 2, single buffered']
    #allocation3 [shape = 's32[1]{0}', space=sflag, size = 0x4, scoped, tag = 'scoped memory for net_forward.1']
    #allocation4 [shape = 's32[1]{0}', space=sflag, size = 0x4, scoped, tag = 'scoped memory for net_forward.1']
    #allocation5 [shape = 'u8[262144]{0}', space=vmem, size = 0x40000, scoped, tag = 'input window, operand 3, single buffered']
    #allocation6 [shape = 's32[1]{0}', space=sflag, size = 0x4, scoped, tag = 'scoped memory for net_forward.1']
    #allocation7 [shape = 'u8[131072]{0}', space=vmem, size = 0x20000, scoped, tag = 'input window, operand 5, single buffered']
    #allocation8 [shape = 'u8[4096]{0}', space=vmem, size = 0x1000, scoped, tag = 'output window, operand 0, single buffered']
    %12 = vsyncpa [#allocation3], 0
    %13 = vsyncpa [#allocation6], 0
    %14 = vsyncpa [#allocation4], 0
    // Predicated region
    $region2: #{net_forward.1} parent=1 // pred_check
      _
    $region3: #{net_forward.1} parent=1 // pred_check_branch
      %16 = sbr.rel (0) target = $region5
    $region4: #{net_forward.1} parent=1 // pred_region
      _
    $region5: #{net_forward.1} parent=1 // pred_fallthru
      _
    // Predicated region
    $region6: #{net_forward.1} parent=1 // pred_check
      _
    $region7: #{net_forward.1} parent=1 // pred_check_branch
      %18 = sbr.rel (0) target = $region9
    $region8: #{net_forward.1} parent=1 // pred_region
      _
    $region9: #{net_forward.1} parent=1 // pred_fallthru
      _
    // Predicated region
    $region10: #{net_forward.1} parent=1 // pred_check
      _
    $region11: #{net_forward.1} parent=1 // pred_check_branch
      %20 = sbr.rel (0) target = $region13
    $region12: #{net_forward.1} parent=1 // pred_region
      %22 = vsyncadd [#allocation3], 0
      %s23 = sshll.u32 %s2, 4
      %s24 = int_to_ptr.hbm [resolvable:$true] %s23
      %s25 = sshll.u32 [#allocation2], 4
      %s26 = int_to_ptr.vmem [resolvable:$true] %s25
      %31 = dma.hbm_to_vmem [thread:$0]  %s24, 1024, %s26, [#allocation3], 256, 256, 16
    $region13: #{net_forward.1} parent=1 // pred_fallthru
      _
    // Predicated region
    $region14: #{net_forward.1} parent=1 // pred_check
      _
    $region15: #{net_forward.1} parent=1 // pred_check_branch
      %33 = sbr.rel (0) target = $region17
    $region16: #{net_forward.1} parent=1 // pred_region
      %35 = vsyncadd [#allocation6], 0
      %s36 = sshll.u32 %s3, 4
      %s37 = int_to_ptr.hbm [resolvable:$true] %s36
      %s38 = sshll.u32 [#allocation5], 4
      %s39 = int_to_ptr.vmem [resolvable:$true] %s38
      %44 = dma.hbm_to_vmem [thread:$0]  %s37, 8192, %s39, [#allocation6], 256, 256, 16
    $region17: #{net_forward.1} parent=1 // pred_fallthru
      _
    // Predicated region
    $region18: #{net_forward.1} parent=1 // pred_check
      _
    $region19: #{net_forward.1} parent=1 // pred_check_branch
      %46 = sbr.rel (0) target = $region21
    $region20: #{net_forward.1} parent=1 // pred_region
      _
    $region21: #{net_forward.1} parent=1 // pred_fallthru
      _
    // Predicated region
    $region22: #{net_forward.1} parent=1 // pred_check
      _
    $region23: #{net_forward.1} parent=1 // pred_check_branch
      %48 = sbr.rel (0) target = $region25
    $region24: #{net_forward.1} parent=1 // pred_region
      %50 = vsyncadd [#allocation6], 0
      %s51 = sshll.u32 %s5, 4
      %s52 = int_to_ptr.hbm [resolvable:$true] %s51
      %s53 = sshll.u32 [#allocation7], 4
      %s54 = int_to_ptr.vmem [resolvable:$true] %s53
      %59 = dma.hbm_to_vmem [thread:$0]  %s52, 4096, %s54, [#allocation6], 128, 128, 8
    $region25: #{net_forward.1} parent=1 // pred_fallthru
      _
    // Predicated region
    $region26: #{net_forward.1} parent=1 // pred_check
      _
    $region27: #{net_forward.1} parent=1 // pred_check_branch
      %61 = sbr.rel (0) target = $region29
    $region28: #{net_forward.1} parent=1 // pred_region
      _
    $region29: #{net_forward.1} parent=1 // pred_fallthru
      _
    // Predicated region
    $region30: #{net_forward.1} parent=1 // pred_check
      _
    $region31: #{net_forward.1} parent=1 // pred_check_branch
      %63 = sbr.rel (0) target = $region33
    $region32: #{net_forward.1} parent=1 // pred_region
      %65 = dma.done [#allocation3], 1024
    $region33: #{net_forward.1} parent=1 // pred_fallthru
      _
    // Predicated region
    $region34: #{net_forward.1} parent=1 // pred_check
      _
    $region35: #{net_forward.1} parent=1 // pred_check_branch
      %67 = sbr.rel (0) target = $region37
    $region36: #{net_forward.1} parent=1 // pred_region
      %69 = dma.done [#allocation6], 8192
    $region37: #{net_forward.1} parent=1 // pred_fallthru
      _
    // Predicated region
    $region38: #{net_forward.1} parent=1 // pred_check
      _
    $region39: #{net_forward.1} parent=1 // pred_check_branch
      %71 = sbr.rel (0) target = $region41
    $region40: #{net_forward.1} parent=1 // pred_region
      %73 = dma.done [#allocation6], 4096
    $region41: #{net_forward.1} parent=1 // pred_fallthru
      _
    %v74 = vlaneseq
    %v75 = vand.u32 %v74, 127
    %v76 = vadd.s32 %v75, 128
    %v77 = vld [vmem:[%s0] sm:$0xff]
    %78 = vset.pattern.permute.xlu0 0
    %79 = vperm.xlu0 %78, %v77
    %v80 = vpop.permute.xlu0 %79
    %vm81 = vcmp.eq.s32.totalorder %v75, %v80
    %vm82 = vcmp.eq.s32.totalorder %v76, %v80
    %v83 = vsel %vm81, 1, 0
    %v84 = vsel %vm82, 1, 0
    %v85 = vcvt.s32.f32 %v83
    %v86 = vcvt.s32.f32 %v84
    %v87 = vadd.f32 %v85, 0.0
    %v88 = vadd.f32 %v86, 0.0
    %v89 = vadd.s32 %v77, 64
    %90 = vset.pattern.permute.xlu0 1
    %91 = vperm.xlu0 %90, %v89
    %v92 = vpop.permute.xlu0 %91
    %vm93 = vcmp.eq.s32.totalorder %v75, %v92
    %vm94 = vcmp.eq.s32.totalorder %v76, %v92
    %v95 = vsel %vm93, 1, 0
    %v96 = vsel %vm94, 1, 0
    %v97 = vcvt.s32.f32 %v95
    %v98 = vcvt.s32.f32 %v96
    %v99 = vadd.f32 %v87, %v97
    %v100 = vadd.f32 %v88, %v98
    %v101 = vadd.s32 %v77, 128
    %102 = vset.pattern.permute.xlu0 2
    %103 = vperm.xlu0 %102, %v101
    %v104 = vpop.permute.xlu0 %103
    %vm105 = vcmp.eq.s32.totalorder %v75, %v104
    %vm106 = vcmp.eq.s32.totalorder %v76, %v104
    %v107 = vsel %vm105, 1, 0
    %v108 = vsel %vm106, 1, 0
    %v109 = vcvt.s32.f32 %v107
    %v110 = vcvt.s32.f32 %v108
    %v111 = vadd.f32 %v99, %v109
    %v112 = vadd.f32 %v100, %v110
    %v113 = vadd.s32 %v77, 192
    %114 = vset.pattern.permute.xlu0 3
    %115 = vperm.xlu0 %114, %v113
    %v116 = vpop.permute.xlu0 %115
    %vm117 = vcmp.eq.s32.totalorder %v75, %v116
    %vm118 = vcmp.eq.s32.totalorder %v76, %v116
    %v119 = vsel %vm117, 1, 0
    %v120 = vsel %vm118, 1, 0
    %v121 = vcvt.s32.f32 %v119
    %v122 = vcvt.s32.f32 %v120
    %v123 = vadd.f32 %v111, %v121
    %v124 = vadd.f32 %v112, %v122
    %v125 = vld [vmem:[%s1] sm:$0xff]
    %v126 = vld [vmem:[#allocation2] sm:$0xff]
    %v127 = vld [vmem:[#allocation2 + $0x8] sm:$0xff]
    %v128 = vld [vmem:[#allocation2 + $0x10] sm:$0xff]
    %v129 = vld [vmem:[#allocation2 + $0x18] sm:$0xff]
    %v130 = vld [vmem:[#allocation2 + $0x20] sm:$0xff]
    %v131 = vld [vmem:[#allocation2 + $0x28] sm:$0xff]
    %v132 = vld [vmem:[#allocation2 + $0x30] sm:$0xff]
    %v133 = vld [vmem:[#allocation2 + $0x38] sm:$0xff]
    %v134 = vld [vmem:[#allocation5] sm:$0xff]
    %v135 = vld [vmem:[#allocation5 + $0x8] sm:$0xff]
    %v136 = vld [vmem:[#allocation5 + $0x10] sm:$0xff]
    %v137 = vld [vmem:[#allocation5 + $0x18] sm:$0xff]
    %v138 = vld [vmem:[#allocation5 + $0x20] sm:$0xff]
    %v139 = vld [vmem:[#allocation5 + $0x28] sm:$0xff]
    %v140 = vld [vmem:[#allocation5 + $0x30] sm:$0xff]
    %v141 = vld [vmem:[#allocation5 + $0x38] sm:$0xff]
    %v142 = vld [vmem:[#allocation5 + $0x40] sm:$0xff]
    %v143 = vld [vmem:[#allocation5 + $0x48] sm:$0xff]
    %v144 = vld [vmem:[#allocation5 + $0x50] sm:$0xff]
    %v145 = vld [vmem:[#allocation5 + $0x58] sm:$0xff]
    %v146 = vld [vmem:[#allocation5 + $0x60] sm:$0xff]
    %v147 = vld [vmem:[#allocation5 + $0x68] sm:$0xff]
    %v148 = vld [vmem:[#allocation5 + $0x70] sm:$0xff]
    %v149 = vld [vmem:[#allocation5 + $0x78] sm:$0xff]
    %v150 = vld [vmem:[#allocation5 + $0x80] sm:$0xff]
    %v151 = vld [vmem:[#allocation5 + $0x88] sm:$0xff]
    %v152 = vld [vmem:[#allocation5 + $0x90] sm:$0xff]
    %v153 = vld [vmem:[#allocation5 + $0x98] sm:$0xff]
    %v154 = vld [vmem:[#allocation5 + $0xa0] sm:$0xff]
    %v155 = vld [vmem:[#allocation5 + $0xa8] sm:$0xff]
    %v156 = vld [vmem:[#allocation5 + $0xb0] sm:$0xff]
    %v157 = vld [vmem:[#allocation5 + $0xb8] sm:$0xff]
    %v158 = vld [vmem:[#allocation5 + $0xc0] sm:$0xff]
    %v159 = vld [vmem:[#allocation5 + $0xc8] sm:$0xff]
    %v160 = vld [vmem:[#allocation5 + $0xd0] sm:$0xff]
    %v161 = vld [vmem:[#allocation5 + $0xd8] sm:$0xff]
    %v162 = vld [vmem:[#allocation5 + $0xe0] sm:$0xff]
    %v163 = vld [vmem:[#allocation5 + $0xe8] sm:$0xff]
    %v164 = vld [vmem:[#allocation5 + $0xf0] sm:$0xff]
    %v165 = vld [vmem:[#allocation5 + $0xf8] sm:$0xff]
    %v166 = vld [vmem:[#allocation5 + $0x100] sm:$0xff]
    %v167 = vld [vmem:[#allocation5 + $0x108] sm:$0xff]
    %v168 = vld [vmem:[#allocation5 + $0x110] sm:$0xff]
    %v169 = vld [vmem:[#allocation5 + $0x118] sm:$0xff]
    %v170 = vld [vmem:[#allocation5 + $0x120] sm:$0xff]
    %v171 = vld [vmem:[#allocation5 + $0x128] sm:$0xff]
    %v172 = vld [vmem:[#allocation5 + $0x130] sm:$0xff]
    %v173 = vld [vmem:[#allocation5 + $0x138] sm:$0xff]
    %v174 = vld [vmem:[#allocation5 + $0x140] sm:$0xff]
    %v175 = vld [vmem:[#allocation5 + $0x148] sm:$0xff]
    %v176 = vld [vmem:[#allocation5 + $0x150] sm:$0xff]
    %v177 = vld [vmem:[#allocation5 + $0x158] sm:$0xff]
    %v178 = vld [vmem:[#allocation5 + $0x160] sm:$0xff]
    %v179 = vld [vmem:[#allocation5 + $0x168] sm:$0xff]
    %v180 = vld [vmem:[#allocation5 + $0x170] sm:$0xff]
    %v181 = vld [vmem:[#allocation5 + $0x178] sm:$0xff]
    %v182 = vld [vmem:[#allocation5 + $0x180] sm:$0xff]
    %v183 = vld [vmem:[#allocation5 + $0x188] sm:$0xff]
    %v184 = vld [vmem:[#allocation5 + $0x190] sm:$0xff]
    %v185 = vld [vmem:[#allocation5 + $0x198] sm:$0xff]
    %v186 = vld [vmem:[#allocation5 + $0x1a0] sm:$0xff]
    %v187 = vld [vmem:[#allocation5 + $0x1a8] sm:$0xff]
    %v188 = vld [vmem:[#allocation5 + $0x1b0] sm:$0xff]
    %v189 = vld [vmem:[#allocation5 + $0x1b8] sm:$0xff]
    %v190 = vld [vmem:[#allocation5 + $0x1c0] sm:$0xff]
    %v191 = vld [vmem:[#allocation5 + $0x1c8] sm:$0xff]
    %v192 = vld [vmem:[#allocation5 + $0x1d0] sm:$0xff]
    %v193 = vld [vmem:[#allocation5 + $0x1d8] sm:$0xff]
    %v194 = vld [vmem:[#allocation5 + $0x1e0] sm:$0xff]
    %v195 = vld [vmem:[#allocation5 + $0x1e8] sm:$0xff]
    %v196 = vld [vmem:[#allocation5 + $0x1f0] sm:$0xff]
    %v197 = vld [vmem:[#allocation5 + $0x1f8] sm:$0xff]
    %198 = vmatpush.msra.mxu0 %v164
    %199 = vmatpush.msra.mxu0 %v162
    %200 = vmatpush.msra.mxu0 %v160
    %201 = vmatpush.msra.mxu0 %v158
    %202 = vmatpush.msra.mxu0 %v156
    %203 = vmatpush.msra.mxu0 %v154
    %204 = vmatpush.msra.mxu0 %v152
    %205 = vmatpush.msra.mxu0 %v150
    %206 = vmatpush.msra.mxu0 %v148
    %207 = vmatpush.msra.mxu0 %v146
    %208 = vmatpush.msra.mxu0 %v144
    %209 = vmatpush.msra.mxu0 %v142
    %210 = vmatpush.msra.mxu0 %v140
    %211 = vmatpush.msra.mxu0 %v138
    %212 = vmatpush.msra.mxu0 %v136
    %213 = vmatpush.msra.mxu0 %v134
    %214 = vmatmul.f32.gmra.mxu0 %v123
    %v215 = vpop.f32.mrf.mxu0
    %v216 = vadd.f32 0.0, %v215
    %217 = vdwg.mxu0
    %218 = vmatpush.msra.mxu0 %v196
    %219 = vmatpush.msra.mxu0 %v194
    %220 = vmatpush.msra.mxu0 %v192
    %221 = vmatpush.msra.mxu0 %v190
    %222 = vmatpush.msra.mxu0 %v188
    %223 = vmatpush.msra.mxu0 %v186
    %224 = vmatpush.msra.mxu0 %v184
    %225 = vmatpush.msra.mxu0 %v182
    %226 = vmatpush.msra.mxu0 %v180
    %227 = vmatpush.msra.mxu0 %v178
    %228 = vmatpush.msra.mxu0 %v176
    %229 = vmatpush.msra.mxu0 %v174
    %230 = vmatpush.msra.mxu0 %v172
    %231 = vmatpush.msra.mxu0 %v170
    %232 = vmatpush.msra.mxu0 %v168
    %233 = vmatpush.msra.mxu0 %v166
    %234 = vmatmul.f32.gmra.mxu0 %v124
    %v235 = vpop.f32.mrf.mxu0
    %v236 = vadd.f32 %v216, %v235
    %237 = vdwg.mxu0
    %238 = vmatpush.msra.mxu0 %v165
    %239 = vmatpush.msra.mxu0 %v163
    %240 = vmatpush.msra.mxu0 %v161
    %241 = vmatpush.msra.mxu0 %v159
    %242 = vmatpush.msra.mxu0 %v157
    %243 = vmatpush.msra.mxu0 %v155
    %244 = vmatpush.msra.mxu0 %v153
    %245 = vmatpush.msra.mxu0 %v151
    %246 = vmatpush.msra.mxu0 %v149
    %247 = vmatpush.msra.mxu0 %v147
    %248 = vmatpush.msra.mxu0 %v145
    %249 = vmatpush.msra.mxu0 %v143
    %250 = vmatpush.msra.mxu0 %v141
    %251 = vmatpush.msra.mxu0 %v139
    %252 = vmatpush.msra.mxu0 %v137
    %253 = vmatpush.msra.mxu0 %v135
    %254 = vmatmul.f32.gmra.mxu0 %v123
    %v255 = vpop.f32.mrf.mxu0
    %v256 = vadd.f32 0.0, %v255
    %257 = vdwg.mxu0
    %258 = vmatpush.msra.mxu0 %v197
    %259 = vmatpush.msra.mxu0 %v195
    %260 = vmatpush.msra.mxu0 %v193
    %261 = vmatpush.msra.mxu0 %v191
    %262 = vmatpush.msra.mxu0 %v189
    %263 = vmatpush.msra.mxu0 %v187
    %264 = vmatpush.msra.mxu0 %v185
    %265 = vmatpush.msra.mxu0 %v183
    %266 = vmatpush.msra.mxu0 %v181
    %267 = vmatpush.msra.mxu0 %v179
    %268 = vmatpush.msra.mxu0 %v177
    %269 = vmatpush.msra.mxu0 %v175
    %270 = vmatpush.msra.mxu0 %v173
    %271 = vmatpush.msra.mxu0 %v171
    %272 = vmatpush.msra.mxu0 %v169
    %273 = vmatpush.msra.mxu0 %v167
    %274 = vmatmul.f32.gmra.mxu0 %v124
    %v275 = vpop.f32.mrf.mxu0
    %v276 = vadd.f32 %v256, %v275
    %277 = vdwg.mxu0
    %vm278 = vcmask 261120
    %v280 = vsel %vm278, %v125, 0
    %282 = vmatpush.msra.mxu0 0.0
    %283 = vmatpush.msra.mxu0 0.0
    %284 = vmatpush.msra.mxu0 0.0
    %285 = vmatpush.msra.mxu0 0.0
    %286 = vmatpush.msra.mxu0 0.0
    %287 = vmatpush.msra.mxu0 0.0
    %288 = vmatpush.msra.mxu0 0.0
    %289 = vmatpush.msra.mxu0 0.0
    %290 = vmatpush.msra.mxu0 0.0
    %291 = vmatpush.msra.mxu0 0.0
    %292 = vmatpush.msra.mxu0 0.0
    %293 = vmatpush.msra.mxu0 0.0
    %294 = vmatpush.msra.mxu0 %v132
    %295 = vmatpush.msra.mxu0 %v130
    %296 = vmatpush.msra.mxu0 %v128
    %297 = vmatpush.msra.mxu0 %v126
    %298 = vmatmul.f32.gmra.mxu0 %v280
    %v299 = vpop.f32.mrf.mxu0
    %v300 = vadd.f32 %v236, %v299
    %301 = vdwg.mxu0
    %302 = vmatpush.msra.mxu0 0.0
    %303 = vmatpush.msra.mxu0 0.0
    %304 = vmatpush.msra.mxu0 0.0
    %305 = vmatpush.msra.mxu0 0.0
    %306 = vmatpush.msra.mxu0 0.0
    %307 = vmatpush.msra.mxu0 0.0
    %308 = vmatpush.msra.mxu0 0.0
    %309 = vmatpush.msra.mxu0 0.0
    %310 = vmatpush.msra.mxu0 0.0
    %311 = vmatpush.msra.mxu0 0.0
    %312 = vmatpush.msra.mxu0 0.0
    %313 = vmatpush.msra.mxu0 0.0
    %314 = vmatpush.msra.mxu0 %v133
    %315 = vmatpush.msra.mxu0 %v131
    %316 = vmatpush.msra.mxu0 %v129
    %317 = vmatpush.msra.mxu0 %v127
    %318 = vmatmul.f32.gmra.mxu0 %v280
    %v319 = vpop.f32.mrf.mxu0
    %v320 = vadd.f32 %v276, %v319
    %321 = vdwg.mxu0
    %v322 = vld [vmem:[%s4] sm:$0x3]
    %v324 = vperm.slane %v322, 0
    %v325 = vperm.slane %v322, 1
    %v328 = vadd.f32 %v300, %v324
    %v329 = vadd.f32 %v320, %v325
    %v330 = vtanh.pop %v328
    %v331 = vtanh.pop %v329
    %v332 = vld [vmem:[#allocation7] sm:$0xff]
    %v333 = vld [vmem:[#allocation7 + $0x8] sm:$0xff]
    %v334 = vld [vmem:[#allocation7 + $0x10] sm:$0xff]
    %v335 = vld [vmem:[#allocation7 + $0x18] sm:$0xff]
    %v336 = vld [vmem:[#allocation7 + $0x20] sm:$0xff]
    %v337 = vld [vmem:[#allocation7 + $0x28] sm:$0xff]
    %v338 = vld [vmem:[#allocation7 + $0x30] sm:$0xff]
    %v339 = vld [vmem:[#allocation7 + $0x38] sm:$0xff]
    %v340 = vld [vmem:[#allocation7 + $0x40] sm:$0xff]
    %v341 = vld [vmem:[#allocation7 + $0x48] sm:$0xff]
    %v342 = vld [vmem:[#allocation7 + $0x50] sm:$0xff]
    %v343 = vld [vmem:[#allocation7 + $0x58] sm:$0xff]
    %v344 = vld [vmem:[#allocation7 + $0x60] sm:$0xff]
    %v345 = vld [vmem:[#allocation7 + $0x68] sm:$0xff]
    %v346 = vld [vmem:[#allocation7 + $0x70] sm:$0xff]
    %v347 = vld [vmem:[#allocation7 + $0x78] sm:$0xff]
    %v348 = vld [vmem:[#allocation7 + $0x80] sm:$0xff]
    %v349 = vld [vmem:[#allocation7 + $0x88] sm:$0xff]
    %v350 = vld [vmem:[#allocation7 + $0x90] sm:$0xff]
    %v351 = vld [vmem:[#allocation7 + $0x98] sm:$0xff]
    %v352 = vld [vmem:[#allocation7 + $0xa0] sm:$0xff]
    %v353 = vld [vmem:[#allocation7 + $0xa8] sm:$0xff]
    %v354 = vld [vmem:[#allocation7 + $0xb0] sm:$0xff]
    %v355 = vld [vmem:[#allocation7 + $0xb8] sm:$0xff]
    %v356 = vld [vmem:[#allocation7 + $0xc0] sm:$0xff]
    %v357 = vld [vmem:[#allocation7 + $0xc8] sm:$0xff]
    %v358 = vld [vmem:[#allocation7 + $0xd0] sm:$0xff]
    %v359 = vld [vmem:[#allocation7 + $0xd8] sm:$0xff]
    %v360 = vld [vmem:[#allocation7 + $0xe0] sm:$0xff]
    %v361 = vld [vmem:[#allocation7 + $0xe8] sm:$0xff]
    %v362 = vld [vmem:[#allocation7 + $0xf0] sm:$0xff]
    %v363 = vld [vmem:[#allocation7 + $0xf8] sm:$0xff]
    %v364 = vld [vmem:[%s6] sm:$0x1]
    %v366 = vperm.slane %v364, 0
    %368 = vmatpush.msra.mxu0 %v347
    %369 = vmatpush.msra.mxu0 %v346
    %370 = vmatpush.msra.mxu0 %v345
    %371 = vmatpush.msra.mxu0 %v344
    %372 = vmatpush.msra.mxu0 %v343
    %373 = vmatpush.msra.mxu0 %v342
    %374 = vmatpush.msra.mxu0 %v341
    %375 = vmatpush.msra.mxu0 %v340
    %376 = vmatpush.msra.mxu0 %v339
    %377 = vmatpush.msra.mxu0 %v338
    %378 = vmatpush.msra.mxu0 %v337
    %379 = vmatpush.msra.mxu0 %v336
    %380 = vmatpush.msra.mxu0 %v335
    %381 = vmatpush.msra.mxu0 %v334
    %382 = vmatpush.msra.mxu0 %v333
    %383 = vmatpush.msra.mxu0 %v332
    %384 = vmatmul.f32.gmra.mxu0 %v330
    %v385 = vpop.f32.mrf.mxu0
    %v386 = vadd.f32 %v366, %v385
    %387 = vdwg.mxu0
    %388 = vmatpush.msra.mxu0 %v363
    %389 = vmatpush.msra.mxu0 %v362
    %390 = vmatpush.msra.mxu0 %v361
    %391 = vmatpush.msra.mxu0 %v360
    %392 = vmatpush.msra.mxu0 %v359
    %393 = vmatpush.msra.mxu0 %v358
    %394 = vmatpush.msra.mxu0 %v357
    %395 = vmatpush.msra.mxu0 %v356
    %396 = vmatpush.msra.mxu0 %v355
    %397 = vmatpush.msra.mxu0 %v354
    %398 = vmatpush.msra.mxu0 %v353
    %399 = vmatpush.msra.mxu0 %v352
    %400 = vmatpush.msra.mxu0 %v351
    %401 = vmatpush.msra.mxu0 %v350
    %402 = vmatpush.msra.mxu0 %v349
    %403 = vmatpush.msra.mxu0 %v348
    %404 = vmatmul.f32.gmra.mxu0 %v331
    %v405 = vpop.f32.mrf.mxu0
    %v406 = vadd.f32 %v386, %v405
    %407 = vdwg.mxu0
    %408 = vst [vmem:[#allocation8] sm:$0xff] %v406
    // Predicated region
    $region42: #{net_forward.1} parent=1 // pred_check
      _
    $region43: #{net_forward.1} parent=1 // pred_check_branch
      %410 = sbr.rel (0) target = $region45
    $region44: #{net_forward.1} parent=1 // pred_region
      %412 = vsyncadd [#allocation4], 0
      %s414 = sshll.u32 [#allocation8], 4
      %s415 = int_to_ptr.vmem [resolvable:$true] %s414
      %s416 = sshll.u32 %s7, 4
      %s417 = int_to_ptr.hbm [resolvable:$true] %s416
      %419 = dma.vmem_to_hbm [thread:$0]  %s415, 128, %s417, [#allocation4]
    $region45: #{net_forward.1} parent=1 // pred_fallthru
      _
    // Predicated region
    $region46: #{net_forward.1} parent=1 // pred_check
      _
    $region47: #{net_forward.1} parent=1 // pred_check_branch
      %421 = sbr.rel (0) target = $region49
    $region48: #{net_forward.1} parent=1 // pred_region
      %423 = dma.done [#allocation4], 128
    $region49: #{net_forward.1} parent=1 // pred_fallthru
      _
    %424 = vsyncpa [#allocation3], 1
    %425 = vsyncpa [#allocation6], 1
    %426 = vsyncpa [#allocation4], 1

</llo_original>
